<compile_context>
chip_gen: v5e
topology: v5e:2x2
jax: 0.10.0
libtpu: 0.0.40
codegen_flags: <defaults>
</compile_context>

<pallas_src>
import functools

import jax
import jax.numpy as jnp
from jax import lax
from jax.experimental import pallas as pl
from jax.experimental.pallas import tpu as pltpu

HIDDEN = 64


def _actor_mlp_kernel(x_ref, w1_ref, b1_ref, w2_ref, b2_ref, o_ref):
    """Feature-major MLP tile: o^T = tanh(W2 @ relu(W1 @ x^T + b1) + b2)."""
    # In-kernel bf16 cast of the streamed x tile (single HBM pass over x).
    xb = x_ref[...].astype(jnp.bfloat16)                      # (TB, S) bf16
    # h^T = W1 @ x^T : contract S = last dim of both operands (A @ B^T form,
    # same dimension_numbers as the flash-attention q @ k^T pattern).
    ht = lax.dot_general(
        w1_ref[...], xb,
        dimension_numbers=(((1,), (1,)), ((), ())),
        preferred_element_type=jnp.float32)                   # (H, TB) f32
    ht = jnp.maximum(ht + b1_ref[...], 0.0)                   # bias + ReLU, lane-dense f32
    # y^T = W2 @ h^T : standard contraction, lane dim stays TB (dense).
    yt = jnp.dot(w2_ref[...], ht.astype(jnp.bfloat16),
                 preferred_element_type=jnp.float32)          # (A, TB) f32
    yt = jnp.tanh(yt + b2_ref[...])                           # f32 EUP tanh, dense lanes
    o_ref[...] = yt.astype(o_ref.dtype)                       # bf16 lane-dense store


def _choose_batch_tile(batch, block_b):
    """Batch tile: whole batch for small B, else ~block_b rows, lane-aligned,
    with an even grid length when possible (v7x 2-TC sharding)."""
    if batch <= block_b:
        return batch                                  # full-array block (always legal)
    n_steps = pl.cdiv(batch, block_b)
    if n_steps % 2:
        n_steps += 1                                  # keep grid even for 2 TCs
    tb = pl.cdiv(batch, n_steps)
    tb = ((tb + 127) // 128) * 128                    # output lane dim = tb -> 128-aligned
    return tb


@functools.partial(jax.jit, static_argnames=("block_b",))
def actor_mlp(x, w1, b1, w2, b2, *, block_b=16384):
    """y = tanh(relu(x @ W1^T + b1) @ W2^T + b2) with weights in torch (out, in) layout."""
    batch, dim_state = x.shape
    hidden = w1.shape[0]
    dim_act = w2.shape[0]

    # Weights are tiny and VMEM-resident: cast to bf16 at the boundary.
    w1_bf = w1.astype(jnp.bfloat16)                   # (H, S)
    w2_bf = w2.astype(jnp.bfloat16)                   # (A, H)
    # Biases as column vectors (broadcast over the lane/batch dim), kept f32.
    b1_col = b1.reshape(hidden, 1).astype(jnp.float32)
    b2_col = b2.reshape(dim_act, 1).astype(jnp.float32)

    tb = _choose_batch_tile(batch, block_b)
    grid = (pl.cdiv(batch, tb),)                      # ragged tail handled by Pallas

    out_t = pl.pallas_call(
        _actor_mlp_kernel,
        out_shape=jax.ShapeDtypeStruct((dim_act, batch), jnp.bfloat16),
        grid=grid,
        in_specs=[
            pl.BlockSpec((tb, dim_state), lambda i: (i, 0)),        # x tile (streams)
            pl.BlockSpec((hidden, dim_state), lambda i: (0, 0)),    # W1 (resident)
            pl.BlockSpec((hidden, 1), lambda i: (0, 0)),            # b1 (resident)
            pl.BlockSpec((dim_act, hidden), lambda i: (0, 0)),      # W2 (resident)
            pl.BlockSpec((dim_act, 1), lambda i: (0, 0)),           # b2 (resident)
        ],
        out_specs=pl.BlockSpec((dim_act, tb), lambda i: (0, i)),
        compiler_params=pltpu.CompilerParams(
            dimension_semantics=("parallel",)),
    )(x, w1_bf, b1_col, w2_bf, b2_col)

    # Back to the module's (batch, dim_act) f32 contract; dim_act is tiny so this
    # transpose+cast touches far fewer bytes than the x stream.
    return out_t.T.astype(jnp.float32)


def init_params(key, dim_state, dim_act, hidden=HIDDEN):
    """Deterministic init mimicking PyTorch nn.Linear default U(-1/sqrt(in), 1/sqrt(in)).

    Weights stored in PyTorch orientation (out_features, in_features)."""
    k1, k2, k3, k4 = jax.random.split(key, 4)
    bound1 = 1.0 / jnp.sqrt(dim_state)
    bound2 = 1.0 / jnp.sqrt(hidden)
    w1 = jax.random.uniform(k1, (hidden, dim_state), jnp.float32, -bound1, bound1)
    b1 = jax.random.uniform(k2, (hidden,), jnp.float32, -bound1, bound1)
    w2 = jax.random.uniform(k3, (dim_act, hidden), jnp.float32, -bound2, bound2)
    b2 = jax.random.uniform(k4, (dim_act,), jnp.float32, -bound2, bound2)
    return w1, b1, w2, b2


def dummy_actor_wrapper_forward(x, params, is_training=False):
    """JAX equivalent of DummyActorWrapper.forward."""
    del is_training
    action_wo_noise = actor_mlp(x, *params)
    return {"action": action_wo_noise, "action_wo_noise": action_wo_noise}


def _reference(x, params):
    w1, b1, w2, b2 = params
    h = jnp.maximum(x @ w1.T + b1, 0.0)
    return jnp.tanh(h @ w2.T + b2)


if __name__ == "__main__":
    key = jax.random.PRNGKey(0)
    kx, kp, kx2 = jax.random.split(key, 3)

    batch = 8
    dim_state = 16
    dim_act = 4

    params = init_params(kp, dim_state, dim_act)

    # Small demo shape (single full-array block path).
    x = jax.random.normal(kx, (batch, dim_state), dtype=jnp.float32)
    out = dummy_actor_wrapper_forward(x, params)
    jax.block_until_ready(out)

    ref = _reference(x, params)
    assert out["action"].shape == (batch, dim_act)
    # bf16 matmul operands / bf16 output -> relaxed tolerance vs f32 reference.
    assert jnp.allclose(out["action"], ref, atol=2e-2), "small-batch mismatch"
    assert jnp.array_equal(out["action"], out["action_wo_noise"])

    # Larger, non-multiple batch with a small tile to exercise the multi-step
    # grid and the ragged-tail (partial block) path.
    big_b = 1030
    x_big = jax.random.normal(kx2, (big_b, dim_state), dtype=jnp.float32)
    out_big = actor_mlp(x_big, *params, block_b=256)
    jax.block_until_ready(out_big)
    ref_big = _reference(x_big, params)
    assert out_big.shape == (big_b, dim_act)
    assert jnp.allclose(out_big, ref_big, atol=2e-2), "big-batch mismatch"

    print("KERNEL_OK")
</pallas_src>

<mosaic_0001>
module attributes {stable_mosaic.version = 11 : i64} {
  func.func @_actor_mlp_kernel(%arg0: i32, %arg1: memref<8x16xf32, #tpu.memory_space<vmem>>, %arg2: memref<64x16xbf16, #tpu.memory_space<vmem>>, %arg3: memref<64x1xf32, #tpu.memory_space<vmem>>, %arg4: memref<4x64xbf16, #tpu.memory_space<vmem>>, %arg5: memref<4x1xf32, #tpu.memory_space<vmem>>, %arg6: memref<4x8xbf16, #tpu.memory_space<vmem>>) attributes {dimension_semantics = [#tpu.dimension_semantics<parallel>], iteration_bounds = array<i64: 1>, scalar_prefetch = 0 : i64, scratch_operands = 0 : i64, tpu.core_type = #tpu.core_type<tc>, window_params = [{transform_indices = @transform_0, window_bounds = array<i64: 8, 16>}, {pipeline_mode = #tpu.pipeline_mode<synchronous>, transform_indices = @transform_1, window_bounds = array<i64: 64, 16>}, {pipeline_mode = #tpu.pipeline_mode<synchronous>, transform_indices = @transform_2, window_bounds = array<i64: 64, 1>}, {pipeline_mode = #tpu.pipeline_mode<synchronous>, transform_indices = @transform_3, window_bounds = array<i64: 4, 64>}, {pipeline_mode = #tpu.pipeline_mode<synchronous>, transform_indices = @transform_4, window_bounds = array<i64: 4, 1>}, {transform_indices = @transform_5, window_bounds = array<i64: 4, 8>}]} {
    %c0 = arith.constant 0 : index
    %c0_0 = arith.constant 0 : index
    %0 = vector.load %arg1[%c0, %c0_0] : memref<8x16xf32, #tpu.memory_space<vmem>>, vector<8x16xf32>
    %1 = arith.truncf %0 : vector<8x16xf32> to vector<8x16xbf16>
    %c0_1 = arith.constant 0 : index
    %c0_2 = arith.constant 0 : index
    %2 = vector.load %arg2[%c0_1, %c0_2] : memref<64x16xbf16, #tpu.memory_space<vmem>>, vector<64x16xbf16>
    %cst = arith.constant dense<0.000000e+00> : vector<64x8xf32>
    %3 = tpu.matmul %2, %1, %cst {dimension_numbers = #tpu.dot_dimension_numbers<[1], [1], [0], [0], [0, 0, 1, 0], [], []>} : vector<64x16xbf16>, vector<8x16xbf16>, vector<64x8xf32> -> vector<64x8xf32>
    %c0_3 = arith.constant 0 : index
    %c0_4 = arith.constant 0 : index
    %4 = vector.load %arg3[%c0_3, %c0_4] : memref<64x1xf32, #tpu.memory_space<vmem>>, vector<64x1xf32>
    %5 = vector.broadcast %4 : vector<64x1xf32> to vector<64x8xf32>
    %6 = arith.addf %3, %5 : vector<64x8xf32>
    %cst_5 = arith.constant 0.000000e+00 : f32
    %7 = vector.broadcast %cst_5 : f32 to vector<64x8xf32>
    %8 = arith.maximumf %6, %7 : vector<64x8xf32>
    %c0_6 = arith.constant 0 : index
    %c0_7 = arith.constant 0 : index
    %9 = vector.load %arg4[%c0_6, %c0_7] : memref<4x64xbf16, #tpu.memory_space<vmem>>, vector<4x64xbf16>
    %10 = arith.truncf %8 : vector<64x8xf32> to vector<64x8xbf16>
    %cst_8 = arith.constant dense<0.000000e+00> : vector<4x8xf32>
    %11 = tpu.matmul %9, %10, %cst_8 {dimension_numbers = #tpu.dot_dimension_numbers<[1], [0], [0], [1], [0, 0, 1, 1], [], []>} : vector<4x64xbf16>, vector<64x8xbf16>, vector<4x8xf32> -> vector<4x8xf32>
    %c0_9 = arith.constant 0 : index
    %c0_10 = arith.constant 0 : index
    %12 = vector.load %arg5[%c0_9, %c0_10] : memref<4x1xf32, #tpu.memory_space<vmem>>, vector<4x1xf32>
    %13 = vector.broadcast %12 : vector<4x1xf32> to vector<4x8xf32>
    %14 = arith.addf %11, %13 : vector<4x8xf32>
    %15 = math.tanh %14 : vector<4x8xf32>
    %16 = arith.truncf %15 : vector<4x8xf32> to vector<4x8xbf16>
    %c0_11 = arith.constant 0 : index
    %c0_12 = arith.constant 0 : index
    %17 = vector.load %arg6[%c0_11, %c0_12] : memref<4x8xbf16, #tpu.memory_space<vmem>>, vector<4x8xbf16>
    tpu.vector_store %arg6[%c0_11, %c0_12], %16 {strides = array<i32>} : memref<4x8xbf16, #tpu.memory_space<vmem>>, vector<4x8xbf16>,
    return
  }
  func.func @transform_0(%arg0: i32) -> (i32, i32) {
    %c0_i32 = arith.constant 0 : i32
    %c0_i32_0 = arith.constant 0 : i32
    return %arg0, %c0_i32 : i32, i32
  }
  func.func @transform_1(%arg0: i32) -> (i32, i32) {
    %c0_i32 = arith.constant 0 : i32
    %c0_i32_0 = arith.constant 0 : i32
    %c0_i32_1 = arith.constant 0 : i32
    return %c0_i32, %c0_i32_0 : i32, i32
  }
  func.func @transform_2(%arg0: i32) -> (i32, i32) {
    %c0_i32 = arith.constant 0 : i32
    %c0_i32_0 = arith.constant 0 : i32
    %c0_i32_1 = arith.constant 0 : i32
    return %c0_i32, %c0_i32_0 : i32, i32
  }
  func.func @transform_3(%arg0: i32) -> (i32, i32) {
    %c0_i32 = arith.constant 0 : i32
    %c0_i32_0 = arith.constant 0 : i32
    %c0_i32_1 = arith.constant 0 : i32
    return %c0_i32, %c0_i32_0 : i32, i32
  }
  func.func @transform_4(%arg0: i32) -> (i32, i32) {
    %c0_i32 = arith.constant 0 : i32
    %c0_i32_0 = arith.constant 0 : i32
    %c0_i32_1 = arith.constant 0 : i32
    return %c0_i32, %c0_i32_0 : i32, i32
  }
  func.func @transform_5(%arg0: i32) -> (i32, i32) {
    %c0_i32 = arith.constant 0 : i32
    %c0_i32_0 = arith.constant 0 : i32
    return %c0_i32, %arg0 : i32, i32
  }
}

</mosaic_0001>

<llo_original>
// kernel: actor_mlp.1
$region0: #{actor_mlp.1}
  #allocation0 [shape = 'u32[]', space=smem, size = 0x4, offset = 0x4, fixed_abs, tag = 'smem constant byte address 0x4 - core index']
  #allocation1 [shape = 'u32[72,128]{1,0:T(1,128)}', space=vmem, size = 0x9000, scoped, tag = 'internal scratch']
  %s0 = inlined_call_operand.vmem [shape: f32[8,16], index: 0, kind: input, shape index: {}]
  %s1 = inlined_call_operand.vmem [shape: bf16[64,16], index: 1, kind: input, shape index: {}]
  %s2 = inlined_call_operand.vmem [shape: f32[64,1], index: 2, kind: input, shape index: {}]
  %s3 = inlined_call_operand.vmem [shape: bf16[4,64], index: 3, kind: input, shape index: {}]
  %s4 = inlined_call_operand.vmem [shape: f32[4,1], index: 4, kind: input, shape index: {}]
  %s5 = inlined_call_operand.vmem [shape: bf16[4,8], index: 5, kind: output, shape index: {}]
  %s6 = sld [smem:[#allocation0]]
  $region30: #{actor_mlp.1} parent=0
    _
  %s8 = ssub.s32 1, %s6
  %s9 = scalar_select 0, %s8, %s6
  // Predicated region
  $region2: #{actor_mlp.1} parent=0 // pred_check
    _
  $region3: #{actor_mlp.1} parent=0 // pred_check_branch
    %11 = sbr.rel (0) target = $region5
  $region4: #{actor_mlp.1} parent=0 // pred_region
    _
  $region5: #{actor_mlp.1} parent=0 // pred_fallthru
    _
  // Predicated region
  $region6: #{actor_mlp.1} parent=0 // pred_check
    _
  $region7: #{actor_mlp.1} parent=0 // pred_check_branch
    %13 = sbr.rel (0) target = $region9
  $region8: #{actor_mlp.1} parent=0 // pred_region
    _
  $region9: #{actor_mlp.1} parent=0 // pred_fallthru
    _
  // Predicated region
  $region10: #{actor_mlp.1} parent=0 // pred_check
    _
  $region11: #{actor_mlp.1} parent=0 // pred_check_branch
    %15 = sbr.rel (0) target = $region13
  $region12: #{actor_mlp.1} parent=0 // pred_region
    _
  $region13: #{actor_mlp.1} parent=0 // pred_fallthru
    _
  // Predicated region
  $region14: #{actor_mlp.1} parent=0 // pred_check
    _
  $region15: #{actor_mlp.1} parent=0 // pred_check_branch
    %17 = sbr.rel (0) target = $region17
  $region16: #{actor_mlp.1} parent=0 // pred_region
    _
  $region17: #{actor_mlp.1} parent=0 // pred_fallthru
    _
  // Predicated region
  $region18: #{actor_mlp.1} parent=0 // pred_check
    _
  $region19: #{actor_mlp.1} parent=0 // pred_check_branch
    %19 = sbr.rel (0) target = $region21
  $region20: #{actor_mlp.1} parent=0 // pred_region
    _
  $region21: #{actor_mlp.1} parent=0 // pred_fallthru
    _
  %v21 = vld [vmem:[%s0] sm:$0xff]
  %v22 = vpack.c.bf16 %v21, %v21
  %v23 = vld [vmem:[%s1] sm:$0xf]
  %v24 = vld [vmem:[%s1 + $0x4] sm:$0xf]
  %v25 = vld [vmem:[%s1 + $0x8] sm:$0xf]
  %v26 = vld [vmem:[%s1 + $0xc] sm:$0xf]
  %v27 = vld [vmem:[%s1 + $0x10] sm:$0xf]
  %v28 = vld [vmem:[%s1 + $0x14] sm:$0xf]
  %v29 = vld [vmem:[%s1 + $0x18] sm:$0xf]
  %v30 = vld [vmem:[%s1 + $0x1c] sm:$0xf]
  %v31 = vld [vmem:[%s2] sm:$0xff]
  %v32 = vld [vmem:[%s2 + $0x8] sm:$0xff]
  %v33 = vld [vmem:[%s2 + $0x10] sm:$0xff]
  %v34 = vld [vmem:[%s2 + $0x18] sm:$0xff]
  %v35 = vld [vmem:[%s2 + $0x20] sm:$0xff]
  %v36 = vld [vmem:[%s2 + $0x28] sm:$0xff]
  %v37 = vld [vmem:[%s2 + $0x30] sm:$0xff]
  %v38 = vld [vmem:[%s2 + $0x38] sm:$0xff]
  %40 = vset.pattern.permute.xlu0 0
  %41 = vperm.xlu0 %40, %v31
  %v42 = vpop.permute.xlu0 %41
  %45 = vset.pattern.permute.xlu0 0
  %46 = vperm.xlu0 %45, %v32
  %v47 = vpop.permute.xlu0 %46
  %50 = vset.pattern.permute.xlu0 0
  %51 = vperm.xlu0 %50, %v33
  %v52 = vpop.permute.xlu0 %51
  %55 = vset.pattern.permute.xlu0 0
  %56 = vperm.xlu0 %55, %v34
  %v57 = vpop.permute.xlu0 %56
  %60 = vset.pattern.permute.xlu0 0
  %61 = vperm.xlu0 %60, %v35
  %v62 = vpop.permute.xlu0 %61
  %65 = vset.pattern.permute.xlu0 0
  %66 = vperm.xlu0 %65, %v36
  %v67 = vpop.permute.xlu0 %66
  %70 = vset.pattern.permute.xlu0 0
  %71 = vperm.xlu0 %70, %v37
  %v72 = vpop.permute.xlu0 %71
  %75 = vset.pattern.permute.xlu0 0
  %76 = vperm.xlu0 %75, %v38
  %v77 = vpop.permute.xlu0 %76
  %v87 = vunpack.c.l.b16 %v23
  %v88 = vunpack.c.l.b16 %v24
  %v89 = vunpack.c.l.b16 %v25
  %v90 = vunpack.c.l.b16 %v26
  %v91 = vunpack.c.l.b16 %v27
  %v92 = vunpack.c.l.b16 %v28
  %v93 = vunpack.c.l.b16 %v29
  %v94 = vunpack.c.l.b16 %v30
  %v95 = vpack.c.b16 %v88, %v87
  %v96 = vpack.c.b16 %v90, %v89
  %v97 = vpack.c.b16 %v92, %v91
  %v98 = vpack.c.b16 %v94, %v93
  %vm99 = vcmask 130048
  %v101 = vsel %vm99, %v95, 0
  %v104 = vsel %vm99, %v96, 0
  %v107 = vsel %vm99, %v97, 0
  %v110 = vsel %vm99, %v98, 0
  %v113 = vsel %vm99, %v22, 0
  %115 = vmatpush.bf16.xpose.msra.mxu0 0
  %116 = vmatpush.bf16.xpose.msra.mxu0 0
  %117 = vmatpush.bf16.xpose.msra.mxu0 0
  %118 = vmatpush.bf16.xpose.msra.mxu0 0
  %119 = vmatpush.bf16.xpose.msra.mxu0 0
  %120 = vmatpush.bf16.xpose.msra.mxu0 0
  %121 = vmatpush.bf16.xpose.msra.mxu0 0
  %122 = vmatpush.bf16.xpose.msra.mxu0 %v113
  %123 = vmatmul.bf16.gmra.mxu0 %v101
  %v124 = vpop.f32.mrf.mxu0
  %v125 = vadd.f32 %v42, %v124
  %v126 = vpop.f32.mrf.mxu0
  %v127 = vadd.f32 %v47, %v126
  %128 = vmatmul.bf16.gmra.mxu0 %v104
  %v129 = vpop.f32.mrf.mxu0
  %v130 = vadd.f32 %v52, %v129
  %v131 = vpop.f32.mrf.mxu0
  %v132 = vadd.f32 %v57, %v131
  %133 = vmatmul.bf16.gmra.mxu0 %v107
  %v134 = vpop.f32.mrf.mxu0
  %v135 = vadd.f32 %v62, %v134
  %v136 = vpop.f32.mrf.mxu0
  %v137 = vadd.f32 %v67, %v136
  %138 = vmatmul.bf16.gmra.mxu0 %v110
  %v139 = vpop.f32.mrf.mxu0
  %v140 = vadd.f32 %v72, %v139
  %v141 = vpop.f32.mrf.mxu0
  %v142 = vadd.f32 %v77, %v141
  %143 = vdwg.mxu0
  %v144 = vmax.f32 %v125, 0.0
  %v145 = vmax.f32 %v127, 0.0
  %v146 = vmax.f32 %v130, 0.0
  %v147 = vmax.f32 %v132, 0.0
  %v148 = vmax.f32 %v135, 0.0
  %v149 = vmax.f32 %v137, 0.0
  %v150 = vmax.f32 %v140, 0.0
  %v151 = vmax.f32 %v142, 0.0
  %v152 = vld [vmem:[%s3] sm:$0x3]
  %v153 = vpack.c.bf16 %v145, %v144
  %v154 = vpack.c.bf16 %v147, %v146
  %v155 = vpack.c.bf16 %v149, %v148
  %v156 = vpack.c.bf16 %v151, %v150
  %v157 = vld [vmem:[%s4] sm:$0xf]
  %159 = vset.pattern.permute.xlu0 0
  %160 = vperm.xlu0 %159, %v157
  %v161 = vpop.permute.xlu0 %160
  %vm163 = vcmask 523264
  %v165 = vsel %vm163, %v152, 0
  %167 = vmatpush.bf16.msra.mxu0 0
  %168 = vmatpush.bf16.msra.mxu0 0
  %169 = vmatpush.bf16.msra.mxu0 0
  %170 = vmatpush.bf16.msra.mxu0 0
  %171 = vmatpush.bf16.msra.mxu0 %v156
  %172 = vmatpush.bf16.msra.mxu0 %v155
  %173 = vmatpush.bf16.msra.mxu0 %v154
  %174 = vmatpush.bf16.msra.mxu0 %v153
  %175 = vmatmul.bf16.gmra.mxu0 %v165
  %v176 = vpop.f32.mrf.mxu0
  %v177 = vadd.f32 %v161, %v176
  %v178 = vpop.f32.mrf.mxu0
  %179 = vdwg.mxu0
  %v180 = vtanh.pop %v177
  %v181 = vpack.c.bf16 %v180, %v180
  %vm182 = vcmask 58368
  %183 = vst.msk [vmem:[%s5] sm:$0x3] %vm182, %v181
  // Predicated region
  $region22: #{actor_mlp.1} parent=0 // pred_check
    _
  $region23: #{actor_mlp.1} parent=0 // pred_check_branch
    %185 = sbr.rel (0) target = $region25
  $region24: #{actor_mlp.1} parent=0 // pred_region
    _
  $region25: #{actor_mlp.1} parent=0 // pred_fallthru
    _
  // Predicated region
  $region26: #{actor_mlp.1} parent=0 // pred_check
    _
  $region27: #{actor_mlp.1} parent=0 // pred_check_branch
    %187 = sbr.rel (0) target = $region29
  $region28: #{actor_mlp.1} parent=0 // pred_region
    _
  $region29: #{actor_mlp.1} parent=0 // pred_fallthru
    _

</llo_original>
